<compile_context>
chip_gen: v7x
topology: tpu7x:2x2x1
jax: 0.10.0
libtpu: 0.0.40
codegen_flags: <defaults>
</compile_context>

<pallas_src>
import jax
import jax.numpy as jnp
from jax.experimental import pallas as pl
from jax.experimental.pallas import tpu as pltpu

_LANES = 1024            # last dim: lane-dense, multiple of 128
_MAX_BLOCK_ROWS = 256    # 256 x 1024 f32 = 1 MiB per block


def _add_kernel(x_ref, o_ref):
    # Elementwise hot path: o = x + x on the VPU (DMA-bound; no compute tricks needed).
    o_ref[...] = x_ref[...] + x_ref[...]


def _round_up(n: int, m: int) -> int:
    return ((n + m - 1) // m) * m


def add_module_forward(x: jax.Array) -> jax.Array:
    """Pallas equivalent of AddModule.forward: returns x + x."""
    if x.size == 0:
        return x + x  # nothing to do

    orig_shape, orig_dtype = x.shape, x.dtype
    n = x.size

    # Sublane multiple depends on dtype packing: 8 for 4-byte, 16 for 2-byte, 32 for 1-byte.
    itemsize = jnp.dtype(orig_dtype).itemsize
    sublane = max(8, 32 // max(1, itemsize))

    rows_needed = _round_up(n, _LANES) // _LANES
    block_rows = min(_MAX_BLOCK_ROWS, _round_up(rows_needed, sublane))
    total_rows = _round_up(rows_needed, block_rows)
    padded = total_rows * _LANES

    flat = x.reshape(-1)
    if padded != n:
        flat = jnp.pad(flat, (0, padded - n))
    x2d = flat.reshape(total_rows, _LANES)

    grid = (total_rows // block_rows,)
    out2d = pl.pallas_call(
        _add_kernel,
        out_shape=jax.ShapeDtypeStruct((total_rows, _LANES), orig_dtype),
        grid=grid,
        in_specs=[pl.BlockSpec((block_rows, _LANES), lambda i: (i, 0))],
        out_specs=pl.BlockSpec((block_rows, _LANES), lambda i: (i, 0)),
        compiler_params=pltpu.CompilerParams(
            dimension_semantics=("parallel",),
        ),
    )(x2d)

    return out2d.reshape(-1)[:n].reshape(orig_shape)


if __name__ == "__main__":
    key = jax.random.PRNGKey(0)
    k1, k2 = jax.random.split(key)

    # 1) Shape matching the module's example_input: (2, 2) float32.
    x_small = jax.random.normal(k1, (2, 2), dtype=jnp.float32)
    out_small = add_module_forward(x_small)
    jax.block_until_ready(out_small)
    exp_small = x_small + x_small
    assert out_small.shape == exp_small.shape and out_small.dtype == exp_small.dtype
    assert jnp.allclose(out_small, exp_small), "mismatch vs reference x + x (small)"

    # 2) Larger shape that exercises the tiled grid / DMA pipeline (2 blocks).
    x_big = jax.random.normal(k2, (2, 256, 1024), dtype=jnp.float32)
    out_big = add_module_forward(x_big)
    jax.block_until_ready(out_big)
    exp_big = x_big + x_big
    assert out_big.shape == exp_big.shape and out_big.dtype == exp_big.dtype
    assert jnp.allclose(out_big, exp_big), "mismatch vs reference x + x (big)"

    print("KERNEL_OK")
</pallas_src>

<mosaic_0001>
module attributes {stable_mosaic.version = 11 : i64} {
  func.func @_add_kernel(%arg0: i32, %arg1: memref<8x1024xf32, #tpu.memory_space<vmem>>, %arg2: memref<8x1024xf32, #tpu.memory_space<vmem>>) attributes {dimension_semantics = [#tpu.dimension_semantics<parallel>], iteration_bounds = array<i64: 1>, scalar_prefetch = 0 : i64, scratch_operands = 0 : i64, tpu.core_type = #tpu.core_type<tc>, window_params = [{transform_indices = @transform_0, window_bounds = array<i64: 8, 1024>}, {transform_indices = @transform_1, window_bounds = array<i64: 8, 1024>}]} {
    %c0 = arith.constant 0 : index
    %c0_0 = arith.constant 0 : index
    %0 = vector.load %arg1[%c0, %c0_0] : memref<8x1024xf32, #tpu.memory_space<vmem>>, vector<8x1024xf32>
    %c0_1 = arith.constant 0 : index
    %c0_2 = arith.constant 0 : index
    %1 = vector.load %arg1[%c0_1, %c0_2] : memref<8x1024xf32, #tpu.memory_space<vmem>>, vector<8x1024xf32>
    %2 = arith.addf %0, %1 : vector<8x1024xf32>
    %c0_3 = arith.constant 0 : index
    %c0_4 = arith.constant 0 : index
    %3 = vector.load %arg2[%c0_3, %c0_4] : memref<8x1024xf32, #tpu.memory_space<vmem>>, vector<8x1024xf32>
    tpu.vector_store %arg2[%c0_3, %c0_4], %2 {strides = array<i32>} : memref<8x1024xf32, #tpu.memory_space<vmem>>, vector<8x1024xf32>,
    return
  }
  func.func @transform_0(%arg0: i32) -> (i32, i32) {
    %c0_i32 = arith.constant 0 : i32
    %c0_i32_0 = arith.constant 0 : i32
    return %arg0, %c0_i32 : i32, i32
  }
  func.func @transform_1(%arg0: i32) -> (i32, i32) {
    %c0_i32 = arith.constant 0 : i32
    %c0_i32_0 = arith.constant 0 : i32
    return %arg0, %c0_i32 : i32, i32
  }
}

</mosaic_0001>

<llo_original>
// kernel: tpu_custom_call.1
$region0: #{tpu_custom_call.1}
  #allocation0 [shape = 'u32[]', space=smem, size = 0x4, offset = 0x4, fixed_abs, tag = 'smem constant byte address 0x4 - core index']
  #allocation1 [shape = 'u32[144,128]{1,0:T(1,128)}', space=vmem, size = 0x12000, scoped, tag = 'internal scratch']
  %s0 = inlined_call_operand.hbm [shape: f32[8,1024], index: 0, kind: input, shape index: {}]
  %s1 = inlined_call_operand.hbm [shape: f32[8,1024], index: 1, kind: output, shape index: {}]
  %s2 = sld [smem:[#allocation0]]
  $region18: #{tpu_custom_call.1} parent=0
    _
  %s4 = ssub.s32 1, %s2
  %s5 = scalar_select 0, %s4, %s2
  $region1: #{tpu_custom_call.1} parent=0
    #allocation2 [shape = 'u8[32768]{0}', space=vmem, size = 0x8000, scoped, tag = 'input window, operand 0, single buffered']
    #allocation3 [shape = 's32[1]{0}', space=sflag, size = 0x4, scoped, tag = 'scoped memory for tpu_custom_call.1']
    #allocation4 [shape = 's32[1]{0}', space=sflag, size = 0x4, scoped, tag = 'scoped memory for tpu_custom_call.1']
    #allocation5 [shape = 'u8[32768]{0}', space=vmem, size = 0x8000, scoped, tag = 'output window, operand 0, single buffered']
    %6 = vsyncpa [#allocation3], 0
    %7 = vsyncpa [#allocation4], 0
    // Predicated region
    $region2: #{tpu_custom_call.1} parent=1 // pred_check
      _
    $region3: #{tpu_custom_call.1} parent=1 // pred_check_branch
      %9 = sbr.rel (0) target = $region5
    $region4: #{tpu_custom_call.1} parent=1 // pred_region
      %s11 = ssub.s32 1024, 1024
      %12 = vsyncadd [#allocation3], %s11
      %s14 = sshll.u32 [#allocation2], 4
      %s15 = int_to_ptr.vmem [resolvable:$true] %s14
      %17 = dma.hbm_to_vmem [thread:$0]  %s0, 1024, %s15, [#allocation3]
    $region5: #{tpu_custom_call.1} parent=1 // pred_fallthru
      _
    // Predicated region
    $region6: #{tpu_custom_call.1} parent=1 // pred_check
      _
    $region7: #{tpu_custom_call.1} parent=1 // pred_check_branch
      %19 = sbr.rel (0) target = $region9
    $region8: #{tpu_custom_call.1} parent=1 // pred_region
      %20 = dma.done [#allocation3], 1024
    $region9: #{tpu_custom_call.1} parent=1 // pred_fallthru
      _
    %v21 = vld [vmem:[#allocation2] sm:$0xff]
    %v22 = vld [vmem:[#allocation2 + $0x8] sm:$0xff]
    %v23 = vld [vmem:[#allocation2 + $0x10] sm:$0xff]
    %v24 = vld [vmem:[#allocation2 + $0x18] sm:$0xff]
    %v25 = vld [vmem:[#allocation2 + $0x20] sm:$0xff]
    %v26 = vld [vmem:[#allocation2 + $0x28] sm:$0xff]
    %v27 = vld [vmem:[#allocation2 + $0x30] sm:$0xff]
    %v28 = vld [vmem:[#allocation2 + $0x38] sm:$0xff]
    %v29 = vadd.f32 %v21, %v21
    %v30 = vadd.f32 %v22, %v22
    %v31 = vadd.f32 %v23, %v23
    %v32 = vadd.f32 %v24, %v24
    %v33 = vadd.f32 %v25, %v25
    %v34 = vadd.f32 %v26, %v26
    %v35 = vadd.f32 %v27, %v27
    %v36 = vadd.f32 %v28, %v28
    %37 = vst [vmem:[#allocation5] sm:$0xff] %v29
    %38 = vst [vmem:[#allocation5 + $0x8] sm:$0xff] %v30
    %39 = vst [vmem:[#allocation5 + $0x10] sm:$0xff] %v31
    %40 = vst [vmem:[#allocation5 + $0x18] sm:$0xff] %v32
    %41 = vst [vmem:[#allocation5 + $0x20] sm:$0xff] %v33
    %42 = vst [vmem:[#allocation5 + $0x28] sm:$0xff] %v34
    %43 = vst [vmem:[#allocation5 + $0x30] sm:$0xff] %v35
    %44 = vst [vmem:[#allocation5 + $0x38] sm:$0xff] %v36
    // Predicated region
    $region10: #{tpu_custom_call.1} parent=1 // pred_check
      _
    $region11: #{tpu_custom_call.1} parent=1 // pred_check_branch
      %46 = sbr.rel (0) target = $region13
    $region12: #{tpu_custom_call.1} parent=1 // pred_region
      %s48 = ssub.s32 1024, 1024
      %49 = vsyncadd [#allocation4], %s48
      %s51 = sshll.u32 [#allocation5], 4
      %s52 = int_to_ptr.vmem [resolvable:$true] %s51
      %54 = dma.vmem_to_hbm [thread:$0]  %s52, 1024, %s1, [#allocation4]
    $region13: #{tpu_custom_call.1} parent=1 // pred_fallthru
      _
    // Predicated region
    $region14: #{tpu_custom_call.1} parent=1 // pred_check
      _
    $region15: #{tpu_custom_call.1} parent=1 // pred_check_branch
      %56 = sbr.rel (0) target = $region17
    $region16: #{tpu_custom_call.1} parent=1 // pred_region
      %57 = dma.done [#allocation4], 1024
    $region17: #{tpu_custom_call.1} parent=1 // pred_fallthru
      _
    %58 = vsyncpa [#allocation3], 1
    %59 = vsyncpa [#allocation4], 1

</llo_original>
